<compile_context>
chip_gen: v7x
topology: tpu7x:2x2x1
jax: 0.10.0
libtpu: 0.0.40
codegen_flags: <defaults>
</compile_context>

<pallas_src>
import jax
import jax.numpy as jnp
from jax import lax
from jax.experimental import pallas as pl
from jax.experimental.pallas import tpu as pltpu

_LANES = 128


def biattention_kernel(x1_ref, x2_ref, wb_ref, o_ref):
    # x1_ref / x2_ref / o_ref : (C, t_sub, 128) VMEM tiles.
    # wb_ref                  : (C + 1,) SMEM — 1x1-conv weights, then bias.
    C = x1_ref.shape[0]
    unrolled = C <= 16  # small C: static ref indices; large C: scf.for

    def x3_plane(c):
        a = x1_ref[c].astype(jnp.float32)
        b = x2_ref[c].astype(jnp.float32)
        return jnp.maximum(a + b, 0.0)                 # relu(x1 + x2), (t_sub, 128)

    # 1x1 conv with a single output channel: s = sum_c x3_c * w_c + bias.
    # Full-density (t_sub, 128) multiply-adds; only one plane + acc live.
    s = x3_plane(0) * wb_ref[0]
    if unrolled:
        for c in range(1, C):
            s = s + x3_plane(c) * wb_ref[c]
    else:
        s = lax.fori_loop(1, C, lambda c, acc: acc + x3_plane(c) * wb_ref[c], s)
    s = s + wb_ref[C]                                  # + bias

    # Dense (t_sub, 128) gate plane; exp lands on the EUP slot.
    alpha = jax.nn.sigmoid(s)

    # out_c = x1_c*alpha + x2_c*(1-alpha) == x2_c + alpha*(x1_c - x2_c)
    # Re-read the input refs per channel (cheap VMEM loads) instead of keeping
    # whole (C, t_sub, 128) values live -> no vreg spills at large tiles.
    def write_plane(c):
        a = x1_ref[c].astype(jnp.float32)
        b = x2_ref[c].astype(jnp.float32)
        o_ref[c] = (b + alpha * (a - b)).astype(o_ref.dtype)

    if unrolled:
        for c in range(C):
            write_plane(c)
    else:
        def body(c, carry):
            write_plane(c)
            return carry
        lax.fori_loop(0, C, body, 0)


def _vmem_budget_bytes():
    """Per-call VMEM buffering budget, derived from the chip (v7x-safe)."""
    try:
        cap = int(pltpu.get_tpu_info().vmem_capacity_bytes)
    except Exception:
        cap = 64 << 20          # assume the smallest: v7x, 64 MiB / TensorCore
    return min(96 << 20, max(16 << 20, cap // 2))


def _pick_sub_tile(n_sub, c, itemsize, budget_bytes, max_sub=2048):
    """#rows of 128 lanes per block.  3 arrays x 2 pipeline buffers of a
    (c, t_sub, 128) tile must fit inside `budget_bytes`."""
    per_row = 6 * c * _LANES * itemsize          # bytes per row across buffers
    cap = max(8, budget_bytes // per_row)
    t = min(n_sub, max_sub, cap)
    if t < n_sub:
        t = max(8, (t // 8) * 8)                 # keep (8, 128) block alignment
    return t


def biattention_pallas(x1_nchw, x2_nchw, weight, bias):
    """x1, x2: (N, C, H, W).  weight: (1, C, 1, 1).  bias: (1,)."""
    N, C, H, W = x1_nchw.shape
    HW = H * W
    hw_pad = -(-HW // _LANES) * _LANES
    n_sub = hw_pad // _LANES

    # NCHW -> (N, C, HW/128, 128): reshape only (plus a pad when HW % 128 != 0;
    # padded locations are computed but sliced off afterwards).
    x1 = x1_nchw.reshape(N, C, HW)
    x2 = x2_nchw.reshape(N, C, HW)
    if hw_pad != HW:
        pad = ((0, 0), (0, 0), (0, hw_pad - HW))
        x1 = jnp.pad(x1, pad)
        x2 = jnp.pad(x2, pad)
    x1 = x1.reshape(N, C, n_sub, _LANES)
    x2 = x2.reshape(N, C, n_sub, _LANES)

    budget = _vmem_budget_bytes()
    t_sub = _pick_sub_tile(n_sub, C, x1.dtype.itemsize, budget)
    grid = (N, pl.cdiv(n_sub, t_sub))            # partial last block is fine

    # 1x1-conv weights + bias packed into one small SMEM vector.
    wb = jnp.concatenate([weight.reshape(C).astype(jnp.float32),
                          bias.reshape(1).astype(jnp.float32)])

    tile_bytes = C * t_sub * _LANES * x1.dtype.itemsize
    vmem_limit = int(min(6 * tile_bytes + (16 << 20), budget + (16 << 20)))

    spec = pl.BlockSpec((None, C, t_sub, _LANES), lambda n, s: (n, 0, s, 0))
    out = pl.pallas_call(
        biattention_kernel,
        out_shape=jax.ShapeDtypeStruct((N, C, n_sub, _LANES), x1_nchw.dtype),
        grid_spec=pltpu.PrefetchScalarGridSpec(
            num_scalar_prefetch=0,
            grid=grid,
            in_specs=[
                spec,
                spec,
                pl.BlockSpec(memory_space=pltpu.MemorySpace.SMEM),
            ],
            out_specs=spec,
        ),
        compiler_params=pltpu.CompilerParams(
            # Both axes independent -> megacore / 2-TC sharding on v7x.
            dimension_semantics=("parallel", "parallel"),
            vmem_limit_bytes=vmem_limit,
        ),
    )(x1, x2, wb)

    out = out.reshape(N, C, hw_pad)
    if hw_pad != HW:
        out = out[:, :, :HW]
    return out.reshape(N, C, H, W)


def biattention_ref(x1, x2, weight, bias):
    """Pure-JAX reference matching the PyTorch forward (NCHW)."""
    x3 = jnp.maximum(x1 + x2, 0.0)
    s = jnp.einsum("nchw,oc->nohw", x3, weight.reshape(1, -1)) \
        + bias.reshape(1, 1, 1, 1)
    alpha = jax.nn.sigmoid(s)
    return x1 * alpha + x2 * (1.0 - alpha)


if __name__ == "__main__":
    key = jax.random.PRNGKey(0)
    k1, k2, kw, kb = jax.random.split(key, 4)

    N, C, H, W = 2, 4, 16, 16
    x1 = jax.random.normal(k1, (N, C, H, W), dtype=jnp.float32)
    x2 = jax.random.normal(k2, (N, C, H, W), dtype=jnp.float32)

    # Deterministic Conv2d(C, 1, kernel_size=1) params (PyTorch-style init range).
    bound = 1.0 / (C ** 0.5)
    weight = jax.random.uniform(kw, (1, C, 1, 1), minval=-bound, maxval=bound,
                                dtype=jnp.float32)
    bias = jax.random.uniform(kb, (1,), minval=-bound, maxval=bound,
                              dtype=jnp.float32)

    out = biattention_pallas(x1, x2, weight, bias)
    out = jax.block_until_ready(out)

    ref = biattention_ref(x1, x2, weight, bias)
    assert out.shape == (N, C, H, W)
    assert jnp.allclose(out, ref, atol=1e-5, rtol=1e-5), "mismatch vs reference"

    print("KERNEL_OK")
</pallas_src>

<mosaic_0001>
module attributes {stable_mosaic.version = 11 : i64} {
  func.func @biattention_kernel(%arg0: i32, %arg1: i32, %arg2: memref<1x4x2x128xf32, #tpu.memory_space<vmem>>, %arg3: memref<1x4x2x128xf32, #tpu.memory_space<vmem>>, %arg4: memref<5xf32, #tpu.memory_space<smem>>, %arg5: memref<1x4x2x128xf32, #tpu.memory_space<vmem>>) attributes {dimension_semantics = [#tpu.dimension_semantics<parallel>, #tpu.dimension_semantics<parallel>], iteration_bounds = array<i64: 2, 1>, scalar_prefetch = 0 : i64, scratch_operands = 0 : i64, tpu.core_type = #tpu.core_type<tc>, window_params = [{transform_indices = @transform_0, window_bounds = array<i64: 1, 4, 2, 128>}, {transform_indices = @transform_1, window_bounds = array<i64: 1, 4, 2, 128>}, {transform_indices = @transform_2, window_bounds = array<i64: 5>}, {transform_indices = @transform_3, window_bounds = array<i64: 1, 4, 2, 128>}]} {
    %c0 = arith.constant 0 : index
    %c0_0 = arith.constant 0 : index
    %c0_1 = arith.constant 0 : index
    %c0_2 = arith.constant 0 : index
    %0 = vector.load %arg2[%c0, %c0_0, %c0_1, %c0_2] : memref<1x4x2x128xf32, #tpu.memory_space<vmem>>, vector<1x1x2x128xf32>
    %1 = vector.shape_cast %0 : vector<1x1x2x128xf32> to vector<2x128xf32>
    %c0_3 = arith.constant 0 : index
    %c0_4 = arith.constant 0 : index
    %c0_5 = arith.constant 0 : index
    %c0_6 = arith.constant 0 : index
    %2 = vector.load %arg3[%c0_3, %c0_4, %c0_5, %c0_6] : memref<1x4x2x128xf32, #tpu.memory_space<vmem>>, vector<1x1x2x128xf32>
    %3 = vector.shape_cast %2 : vector<1x1x2x128xf32> to vector<2x128xf32>
    %4 = arith.addf %1, %3 : vector<2x128xf32>
    %cst = arith.constant 0.000000e+00 : f32
    %5 = vector.broadcast %cst : f32 to vector<2x128xf32>
    %6 = arith.maximumf %4, %5 : vector<2x128xf32>
    %c0_7 = arith.constant 0 : index
    %7 = memref.load %arg4[%c0_7] : memref<5xf32, #tpu.memory_space<smem>>
    %8 = vector.broadcast %7 : f32 to vector<2x128xf32>
    %9 = arith.mulf %6, %8 : vector<2x128xf32>
    %c0_8 = arith.constant 0 : index
    %c1 = arith.constant 1 : index
    %c0_9 = arith.constant 0 : index
    %c0_10 = arith.constant 0 : index
    %10 = vector.load %arg2[%c0_8, %c1, %c0_9, %c0_10] : memref<1x4x2x128xf32, #tpu.memory_space<vmem>>, vector<1x1x2x128xf32>
    %11 = vector.shape_cast %10 : vector<1x1x2x128xf32> to vector<2x128xf32>
    %c0_11 = arith.constant 0 : index
    %c1_12 = arith.constant 1 : index
    %c0_13 = arith.constant 0 : index
    %c0_14 = arith.constant 0 : index
    %12 = vector.load %arg3[%c0_11, %c1_12, %c0_13, %c0_14] : memref<1x4x2x128xf32, #tpu.memory_space<vmem>>, vector<1x1x2x128xf32>
    %13 = vector.shape_cast %12 : vector<1x1x2x128xf32> to vector<2x128xf32>
    %14 = arith.addf %11, %13 : vector<2x128xf32>
    %cst_15 = arith.constant 0.000000e+00 : f32
    %15 = vector.broadcast %cst_15 : f32 to vector<2x128xf32>
    %16 = arith.maximumf %14, %15 : vector<2x128xf32>
    %c1_16 = arith.constant 1 : index
    %17 = memref.load %arg4[%c1_16] : memref<5xf32, #tpu.memory_space<smem>>
    %18 = vector.broadcast %17 : f32 to vector<2x128xf32>
    %19 = arith.mulf %16, %18 : vector<2x128xf32>
    %20 = arith.addf %9, %19 : vector<2x128xf32>
    %c0_17 = arith.constant 0 : index
    %c2 = arith.constant 2 : index
    %c0_18 = arith.constant 0 : index
    %c0_19 = arith.constant 0 : index
    %21 = vector.load %arg2[%c0_17, %c2, %c0_18, %c0_19] : memref<1x4x2x128xf32, #tpu.memory_space<vmem>>, vector<1x1x2x128xf32>
    %22 = vector.shape_cast %21 : vector<1x1x2x128xf32> to vector<2x128xf32>
    %c0_20 = arith.constant 0 : index
    %c2_21 = arith.constant 2 : index
    %c0_22 = arith.constant 0 : index
    %c0_23 = arith.constant 0 : index
    %23 = vector.load %arg3[%c0_20, %c2_21, %c0_22, %c0_23] : memref<1x4x2x128xf32, #tpu.memory_space<vmem>>, vector<1x1x2x128xf32>
    %24 = vector.shape_cast %23 : vector<1x1x2x128xf32> to vector<2x128xf32>
    %25 = arith.addf %22, %24 : vector<2x128xf32>
    %cst_24 = arith.constant 0.000000e+00 : f32
    %26 = vector.broadcast %cst_24 : f32 to vector<2x128xf32>
    %27 = arith.maximumf %25, %26 : vector<2x128xf32>
    %c2_25 = arith.constant 2 : index
    %28 = memref.load %arg4[%c2_25] : memref<5xf32, #tpu.memory_space<smem>>
    %29 = vector.broadcast %28 : f32 to vector<2x128xf32>
    %30 = arith.mulf %27, %29 : vector<2x128xf32>
    %31 = arith.addf %20, %30 : vector<2x128xf32>
    %c0_26 = arith.constant 0 : index
    %c3 = arith.constant 3 : index
    %c0_27 = arith.constant 0 : index
    %c0_28 = arith.constant 0 : index
    %32 = vector.load %arg2[%c0_26, %c3, %c0_27, %c0_28] : memref<1x4x2x128xf32, #tpu.memory_space<vmem>>, vector<1x1x2x128xf32>
    %33 = vector.shape_cast %32 : vector<1x1x2x128xf32> to vector<2x128xf32>
    %c0_29 = arith.constant 0 : index
    %c3_30 = arith.constant 3 : index
    %c0_31 = arith.constant 0 : index
    %c0_32 = arith.constant 0 : index
    %34 = vector.load %arg3[%c0_29, %c3_30, %c0_31, %c0_32] : memref<1x4x2x128xf32, #tpu.memory_space<vmem>>, vector<1x1x2x128xf32>
    %35 = vector.shape_cast %34 : vector<1x1x2x128xf32> to vector<2x128xf32>
    %36 = arith.addf %33, %35 : vector<2x128xf32>
    %cst_33 = arith.constant 0.000000e+00 : f32
    %37 = vector.broadcast %cst_33 : f32 to vector<2x128xf32>
    %38 = arith.maximumf %36, %37 : vector<2x128xf32>
    %c3_34 = arith.constant 3 : index
    %39 = memref.load %arg4[%c3_34] : memref<5xf32, #tpu.memory_space<smem>>
    %40 = vector.broadcast %39 : f32 to vector<2x128xf32>
    %41 = arith.mulf %38, %40 : vector<2x128xf32>
    %42 = arith.addf %31, %41 : vector<2x128xf32>
    %c4 = arith.constant 4 : index
    %43 = memref.load %arg4[%c4] : memref<5xf32, #tpu.memory_space<smem>>
    %44 = vector.broadcast %43 : f32 to vector<2x128xf32>
    %45 = arith.addf %42, %44 : vector<2x128xf32>
    %46 = arith.negf %45 : vector<2x128xf32>
    %47 = math.exp %46 : vector<2x128xf32>
    %cst_35 = arith.constant 1.000000e+00 : f32
    %48 = vector.broadcast %cst_35 : f32 to vector<2x128xf32>
    %49 = arith.addf %48, %47 : vector<2x128xf32>
    %50 = arith.divf %48, %49 : vector<2x128xf32>
    %c0_36 = arith.constant 0 : index
    %c0_37 = arith.constant 0 : index
    %c0_38 = arith.constant 0 : index
    %c0_39 = arith.constant 0 : index
    %51 = vector.load %arg2[%c0_36, %c0_37, %c0_38, %c0_39] : memref<1x4x2x128xf32, #tpu.memory_space<vmem>>, vector<1x1x2x128xf32>
    %52 = vector.shape_cast %51 : vector<1x1x2x128xf32> to vector<2x128xf32>
    %c0_40 = arith.constant 0 : index
    %c0_41 = arith.constant 0 : index
    %c0_42 = arith.constant 0 : index
    %c0_43 = arith.constant 0 : index
    %53 = vector.load %arg3[%c0_40, %c0_41, %c0_42, %c0_43] : memref<1x4x2x128xf32, #tpu.memory_space<vmem>>, vector<1x1x2x128xf32>
    %54 = vector.shape_cast %53 : vector<1x1x2x128xf32> to vector<2x128xf32>
    %55 = arith.subf %52, %54 : vector<2x128xf32>
    %56 = arith.mulf %50, %55 : vector<2x128xf32>
    %57 = arith.addf %54, %56 : vector<2x128xf32>
    %c0_44 = arith.constant 0 : index
    %c0_45 = arith.constant 0 : index
    %c0_46 = arith.constant 0 : index
    %c0_47 = arith.constant 0 : index
    %58 = vector.load %arg5[%c0_44, %c0_45, %c0_46, %c0_47] : memref<1x4x2x128xf32, #tpu.memory_space<vmem>>, vector<1x1x2x128xf32>
    %59 = vector.shape_cast %58 : vector<1x1x2x128xf32> to vector<2x128xf32>
    %60 = vector.shape_cast %57 : vector<2x128xf32> to vector<1x1x2x128xf32>
    tpu.vector_store %arg5[%c0_44, %c0_45, %c0_46, %c0_47], %60 {strides = array<i32>} : memref<1x4x2x128xf32, #tpu.memory_space<vmem>>, vector<1x1x2x128xf32>,
    %c0_48 = arith.constant 0 : index
    %c1_49 = arith.constant 1 : index
    %c0_50 = arith.constant 0 : index
    %c0_51 = arith.constant 0 : index
    %61 = vector.load %arg2[%c0_48, %c1_49, %c0_50, %c0_51] : memref<1x4x2x128xf32, #tpu.memory_space<vmem>>, vector<1x1x2x128xf32>
    %62 = vector.shape_cast %61 : vector<1x1x2x128xf32> to vector<2x128xf32>
    %c0_52 = arith.constant 0 : index
    %c1_53 = arith.constant 1 : index
    %c0_54 = arith.constant 0 : index
    %c0_55 = arith.constant 0 : index
    %63 = vector.load %arg3[%c0_52, %c1_53, %c0_54, %c0_55] : memref<1x4x2x128xf32, #tpu.memory_space<vmem>>, vector<1x1x2x128xf32>
    %64 = vector.shape_cast %63 : vector<1x1x2x128xf32> to vector<2x128xf32>
    %65 = arith.subf %62, %64 : vector<2x128xf32>
    %66 = arith.mulf %50, %65 : vector<2x128xf32>
    %67 = arith.addf %64, %66 : vector<2x128xf32>
    %c0_56 = arith.constant 0 : index
    %c1_57 = arith.constant 1 : index
    %c0_58 = arith.constant 0 : index
    %c0_59 = arith.constant 0 : index
    %68 = vector.load %arg5[%c0_56, %c1_57, %c0_58, %c0_59] : memref<1x4x2x128xf32, #tpu.memory_space<vmem>>, vector<1x1x2x128xf32>
    %69 = vector.shape_cast %68 : vector<1x1x2x128xf32> to vector<2x128xf32>
    %70 = vector.shape_cast %67 : vector<2x128xf32> to vector<1x1x2x128xf32>
    tpu.vector_store %arg5[%c0_56, %c1_57, %c0_58, %c0_59], %70 {strides = array<i32>} : memref<1x4x2x128xf32, #tpu.memory_space<vmem>>, vector<1x1x2x128xf32>,
    %c0_60 = arith.constant 0 : index
    %c2_61 = arith.constant 2 : index
    %c0_62 = arith.constant 0 : index
    %c0_63 = arith.constant 0 : index
    %71 = vector.load %arg2[%c0_60, %c2_61, %c0_62, %c0_63] : memref<1x4x2x128xf32, #tpu.memory_space<vmem>>, vector<1x1x2x128xf32>
    %72 = vector.shape_cast %71 : vector<1x1x2x128xf32> to vector<2x128xf32>
    %c0_64 = arith.constant 0 : index
    %c2_65 = arith.constant 2 : index
    %c0_66 = arith.constant 0 : index
    %c0_67 = arith.constant 0 : index
    %73 = vector.load %arg3[%c0_64, %c2_65, %c0_66, %c0_67] : memref<1x4x2x128xf32, #tpu.memory_space<vmem>>, vector<1x1x2x128xf32>
    %74 = vector.shape_cast %73 : vector<1x1x2x128xf32> to vector<2x128xf32>
    %75 = arith.subf %72, %74 : vector<2x128xf32>
    %76 = arith.mulf %50, %75 : vector<2x128xf32>
    %77 = arith.addf %74, %76 : vector<2x128xf32>
    %c0_68 = arith.constant 0 : index
    %c2_69 = arith.constant 2 : index
    %c0_70 = arith.constant 0 : index
    %c0_71 = arith.constant 0 : index
    %78 = vector.load %arg5[%c0_68, %c2_69, %c0_70, %c0_71] : memref<1x4x2x128xf32, #tpu.memory_space<vmem>>, vector<1x1x2x128xf32>
    %79 = vector.shape_cast %78 : vector<1x1x2x128xf32> to vector<2x128xf32>
    %80 = vector.shape_cast %77 : vector<2x128xf32> to vector<1x1x2x128xf32>
    tpu.vector_store %arg5[%c0_68, %c2_69, %c0_70, %c0_71], %80 {strides = array<i32>} : memref<1x4x2x128xf32, #tpu.memory_space<vmem>>, vector<1x1x2x128xf32>,
    %c0_72 = arith.constant 0 : index
    %c3_73 = arith.constant 3 : index
    %c0_74 = arith.constant 0 : index
    %c0_75 = arith.constant 0 : index
    %81 = vector.load %arg2[%c0_72, %c3_73, %c0_74, %c0_75] : memref<1x4x2x128xf32, #tpu.memory_space<vmem>>, vector<1x1x2x128xf32>
    %82 = vector.shape_cast %81 : vector<1x1x2x128xf32> to vector<2x128xf32>
    %c0_76 = arith.constant 0 : index
    %c3_77 = arith.constant 3 : index
    %c0_78 = arith.constant 0 : index
    %c0_79 = arith.constant 0 : index
    %83 = vector.load %arg3[%c0_76, %c3_77, %c0_78, %c0_79] : memref<1x4x2x128xf32, #tpu.memory_space<vmem>>, vector<1x1x2x128xf32>
    %84 = vector.shape_cast %83 : vector<1x1x2x128xf32> to vector<2x128xf32>
    %85 = arith.subf %82, %84 : vector<2x128xf32>
    %86 = arith.mulf %50, %85 : vector<2x128xf32>
    %87 = arith.addf %84, %86 : vector<2x128xf32>
    %c0_80 = arith.constant 0 : index
    %c3_81 = arith.constant 3 : index
    %c0_82 = arith.constant 0 : index
    %c0_83 = arith.constant 0 : index
    %88 = vector.load %arg5[%c0_80, %c3_81, %c0_82, %c0_83] : memref<1x4x2x128xf32, #tpu.memory_space<vmem>>, vector<1x1x2x128xf32>
    %89 = vector.shape_cast %88 : vector<1x1x2x128xf32> to vector<2x128xf32>
    %90 = vector.shape_cast %87 : vector<2x128xf32> to vector<1x1x2x128xf32>
    tpu.vector_store %arg5[%c0_80, %c3_81, %c0_82, %c0_83], %90 {strides = array<i32>} : memref<1x4x2x128xf32, #tpu.memory_space<vmem>>, vector<1x1x2x128xf32>,
    return
  }
  func.func @transform_0(%arg0: i32, %arg1: i32) -> (i32, i32, i32, i32) {
    %c0_i32 = arith.constant 0 : i32
    %c0_i32_0 = arith.constant 0 : i32
    %c0_i32_1 = arith.constant 0 : i32
    return %arg0, %c0_i32, %arg1, %c0_i32_0 : i32, i32, i32, i32
  }
  func.func @transform_1(%arg0: i32, %arg1: i32) -> (i32, i32, i32, i32) {
    %c0_i32 = arith.constant 0 : i32
    %c0_i32_0 = arith.constant 0 : i32
    %c0_i32_1 = arith.constant 0 : i32
    return %arg0, %c0_i32, %arg1, %c0_i32_0 : i32, i32, i32, i32
  }
  func.func @transform_2(%arg0: i32, %arg1: i32) -> i32 {
    %c0_i32 = arith.constant 0 : i32
    %c0_i32_0 = arith.constant 0 : i32
    return %c0_i32 : i32
  }
  func.func @transform_3(%arg0: i32, %arg1: i32) -> (i32, i32, i32, i32) {
    %c0_i32 = arith.constant 0 : i32
    %c0_i32_0 = arith.constant 0 : i32
    %c0_i32_1 = arith.constant 0 : i32
    return %arg0, %c0_i32, %arg1, %c0_i32_0 : i32, i32, i32, i32
  }
}

</mosaic_0001>

<llo_original>
// kernel: tpu_custom_call.1
$region0: #{tpu_custom_call.1}
  #allocation0 [shape = 'u32[]', space=smem, size = 0x4, offset = 0x4, fixed_abs, tag = 'smem constant byte address 0x4 - core index']
  #allocation1 [shape = 'u32[144,128]{1,0:T(1,128)}', space=vmem, size = 0x12000, scoped, tag = 'internal scratch']
  %s0 = inlined_call_operand.hbm [shape: f32[2,4,2,128], index: 0, kind: input, shape index: {}]
  %s1 = inlined_call_operand.hbm [shape: f32[2,4,2,128], index: 1, kind: input, shape index: {}]
  %s2 = inlined_call_operand.vmem [shape: f32[5], index: 2, kind: input, shape index: {}]
  %s3 = inlined_call_operand.hbm [shape: f32[2,4,2,128], index: 3, kind: output, shape index: {}]
  %s4 = sld [smem:[#allocation0]]
  $region57: #{tpu_custom_call.1} parent=0
    _
  %s6 = ssub.s32 1, %s4
  %s7 = scalar_select 0, %s6, %s4
  $region1: #{tpu_custom_call.1} parent=0
    #allocation2 [shape = 'u8[8192]{0}', space=vmem, size = 0x2000, scoped, tag = 'input window, operand 0']
    #allocation3 [shape = 's32[2]{0}', space=sflag, size = 0x8, scoped, tag = 'scoped memory for tpu_custom_call.1']
    #allocation4 [shape = 's32[2]{0}', space=sflag, size = 0x8, scoped, tag = 'scoped memory for tpu_custom_call.1']
    #allocation5 [shape = 's32[2]{0}', space=sflag, size = 0x8, scoped, tag = 'scoped memory for tpu_custom_call.1']
    #allocation6 [shape = 'u8[8192]{0}', space=vmem, size = 0x2000, scoped, tag = 'input window, operand 1']
    #allocation7 [shape = 's32[2]{0}', space=sflag, size = 0x8, scoped, tag = 'scoped memory for tpu_custom_call.1']
    #allocation8 [shape = 'u8[512]{0}', space=smem, size = 0x200, scoped, tag = 'input window, operand 2, single buffered']
    #allocation9 [shape = 'u8[8192]{0}', space=vmem, size = 0x2000, scoped, tag = 'output window, operand 0']
    %8 = vsyncpa [#allocation3], 0
    %s9 = scalar_lea.sflag [#allocation3], 1
    %10 = vsyncpa %s9, 0
    %11 = vsyncpa [#allocation7], 0
    %s12 = scalar_lea.sflag [#allocation7], 1
    %13 = vsyncpa %s12, 0
    %14 = vsyncpa [#allocation5], 0
    %15 = vsyncpa [#allocation4], 0
    %s16 = scalar_lea.sflag [#allocation4], 1
    %17 = vsyncpa %s16, 0
    loop: start=0, step=1, limit=4
    $region2: #{tpu_custom_call.1} parent=1 // loop_pre_header
      _
    $region3: #{tpu_custom_call.1} parent=1 // loop_header
      %s19 = sphi 0, %s23
      %p20 = scmp.ge.s32.totalorder %s19, 4
      %s26 = sphi 0, %s38
      %s27 = sphi 0, %s34
      %s28 = sphi 0, %s26
      %s29 = sphi 0, %s27
      %s30 = sphi 0, %s28
      %s31 = sphi 0, %s29
      %s43 = sphi 0, %s45
      %s46 = sphi 0, %s43
      %s47 = sphi 0, %s46
      %s63 = sphi 0, %s47
      %s71 = sphi 0, %s73
      %s74 = sphi 0, %s71
      %s75 = sphi 0, %s74
      %s91 = sphi 0, %s75
      %s95 = sphi 0, %s95
      %s97 = sphi 0, %s95
      %s98 = sphi 0, %s97
      %s112 = sphi 0, %s98
      %s120 = sphi 0, %s122
      %s123 = sphi 0, %s120
      %s124 = sphi 0, %s123
      %s140 = sphi 0, %s124
    $region4: #{tpu_custom_call.1} parent=1 // loop_header_branch
      %22 = sbr.rel (%p20) target = $region8
    $region5: #{tpu_custom_call.1} parent=1 // loop_body
      %s24 = ssub.s32 %s19, 1
      %s25 = ssub.s32 %s19, 2
      %s32 = sadd.s32 1, %s27
      %p33 = scmp.ge.s32.totalorder %s32, 1
      %s34 = scalar_select %p33, 0, %s32
      %s35 = sadd.s32 1, %s26
      %s36 = scalar_select %p33, %s35, %s26
      %p37 = scmp.ge.s32.totalorder %s36, 2
      %s38 = scalar_select %p37, 0, %s36
      %s39 = ssub.s32 %s26, %s38
      %s40 = ssub.s32 %s27, %s34
      %s41 = sor.u32 %s39, %s40
      %p42 = scmp.eq.s32.totalorder %s41, 0
      %s44 = sadd.s32 %s43, 1
      %s45 = scalar_select %p42, %s43, %s44
      %p48 = pneg %p42
      %p49 = scmp.eq.s32.totalorder %s19, 1
      %p50 = por %p48, %p49
      %p51 = scmp.ne.s32.totalorder %s43, %s46
      %p52 = scmp.eq.s32.totalorder %s19, 0
      %p53 = por %p51, %p52
      %p54 = scmp.ne.s32.totalorder %s43, %s46
      %p55 = scmp.eq.s32.totalorder %s24, 1
      %p56 = por %p54, %p55
      %p57 = scmp.ne.s32.totalorder %s46, %s47
      %p58 = scmp.eq.s32.totalorder %s24, 0
      %p59 = por %p57, %p58
      %p60 = scmp.ne.s32.totalorder %s46, %s47
      %p61 = scmp.eq.s32.totalorder %s25, 1
      %p62 = por %p60, %p61
      %p64 = scmp.ne.s32.totalorder %s47, %s63
      %p65 = scmp.eq.s32.totalorder %s25, 0
      %p66 = por %p64, %p65
      %s67 = ssub.s32 %s26, %s38
      %s68 = ssub.s32 %s27, %s34
      %s69 = sor.u32 %s67, %s68
      %p70 = scmp.eq.s32.totalorder %s69, 0
      %s72 = sadd.s32 %s71, 1
      %s73 = scalar_select %p70, %s71, %s72
      %p76 = pneg %p70
      %p77 = scmp.eq.s32.totalorder %s19, 1
      %p78 = por %p76, %p77
      %p79 = scmp.ne.s32.totalorder %s71, %s74
      %p80 = scmp.eq.s32.totalorder %s19, 0
      %p81 = por %p79, %p80
      %p82 = scmp.ne.s32.totalorder %s71, %s74
      %p83 = scmp.eq.s32.totalorder %s24, 1
      %p84 = por %p82, %p83
      %p85 = scmp.ne.s32.totalorder %s74, %s75
      %p86 = scmp.eq.s32.totalorder %s24, 0
      %p87 = por %p85, %p86
      %p88 = scmp.ne.s32.totalorder %s74, %s75
      %p89 = scmp.eq.s32.totalorder %s25, 1
      %p90 = por %p88, %p89
      %p92 = scmp.ne.s32.totalorder %s75, %s91
      %p93 = scmp.eq.s32.totalorder %s25, 0
      %p94 = por %p92, %p93
      %s96 = sadd.s32 %s95, 1
      %p99 = scmp.eq.s32.totalorder %s19, 1
      %p100 = scmp.ne.s32.totalorder %s95, %s97
      %p101 = scmp.eq.s32.totalorder %s19, 0
      %p102 = por %p100, %p101
      %p103 = scmp.ne.s32.totalorder %s95, %s97
      %p104 = scmp.eq.s32.totalorder %s24, 1
      %p105 = por %p103, %p104
      %p106 = scmp.ne.s32.totalorder %s97, %s98
      %p107 = scmp.eq.s32.totalorder %s24, 0
      %p108 = por %p106, %p107
      %p109 = scmp.ne.s32.totalorder %s97, %s98
      %p110 = scmp.eq.s32.totalorder %s25, 1
      %p111 = por %p109, %p110
      %p113 = scmp.ne.s32.totalorder %s98, %s112
      %p114 = scmp.eq.s32.totalorder %s25, 0
      %p115 = por %p113, %p114
      %s116 = ssub.s32 %s26, %s38
      %s117 = ssub.s32 %s27, %s34
      %s118 = sor.u32 %s116, %s117
      %p119 = scmp.eq.s32.totalorder %s118, 0
      %s121 = sadd.s32 %s120, 1
      %s122 = scalar_select %p119, %s120, %s121
      %p125 = pneg %p119
      %p126 = scmp.eq.s32.totalorder %s19, 1
      %p127 = por %p125, %p126
      %p128 = scmp.ne.s32.totalorder %s120, %s123
      %p129 = scmp.eq.s32.totalorder %s19, 0
      %p130 = por %p128, %p129
      %p131 = scmp.ne.s32.totalorder %s120, %s123
      %p132 = scmp.eq.s32.totalorder %s24, 1
      %p133 = por %p131, %p132
      %p134 = scmp.ne.s32.totalorder %s123, %s124
      %p135 = scmp.eq.s32.totalorder %s24, 0
      %p136 = por %p134, %p135
      %p137 = scmp.ne.s32.totalorder %s123, %s124
      %p138 = scmp.eq.s32.totalorder %s25, 1
      %p139 = por %p137, %p138
      %p141 = scmp.ne.s32.totalorder %s124, %s140
      %p142 = scmp.eq.s32.totalorder %s25, 0
      %p143 = por %p141, %p142
      %p144 = scmp.le.s32.totalorder 1, %s19
      %p145 = scmp.lt.s32.totalorder %s19, 3
      %p146 = pnand %p144, %p145
      %p147 = pneg %p146
      // Predicated region
      $region9: #{tpu_custom_call.1} parent=5 // pred_check
        _
      $region10: #{tpu_custom_call.1} parent=5 // pred_check_branch
        %149 = sbr.rel (%p146) target = $region12
      $region11: #{tpu_custom_call.1} parent=5 // pred_region
        %s150 = ssub.s32 %s19, 1
        // Predicated region
        $region13: #{tpu_custom_call.1} parent=11 // pred_check
          %p151 = pneg %p108
        $region14: #{tpu_custom_call.1} parent=11 // pred_check_branch
          %153 = sbr.rel (%p151) target = $region16
        $region15: #{tpu_custom_call.1} parent=11 // pred_region
          %s155 = ssub.s32 16, 16
          %156 = vsyncadd [#allocation5], %s155
          %s158 = sshll.u32 %s2, 4
          %s159 = int_to_ptr.vmem [resolvable:$true] %s158
          %161 = dma.vmem_to_smem %s159, 16, [#allocation8], [#allocation5]
        $region16: #{tpu_custom_call.1} parent=11 // pred_fallthru
          _
      $region12: #{tpu_custom_call.1} parent=5 // pred_fallthru
        _
      %p162 = scmp.lt.s32.totalorder %s19, 2
      // Predicated region
      $region17: #{tpu_custom_call.1} parent=5 // pred_check
        %p163 = pneg %p162
      $region18: #{tpu_custom_call.1} parent=5 // pred_check_branch
        %165 = sbr.rel (%p163) target = $region20
      $region19: #{tpu_custom_call.1} parent=5 // pred_region
        // Predicated region
        $region21: #{tpu_custom_call.1} parent=19 // pred_check
          %p166 = pneg %p53
        $region22: #{tpu_custom_call.1} parent=19 // pred_check_branch
          %168 = sbr.rel (%p166) target = $region24
        $region23: #{tpu_custom_call.1} parent=19 // pred_region
          %s169 = sand.u32 %s43, 1
          %s170 = scalar_lea.sflag [#allocation3], %s169
          %s171 = sand.u32 %s43, 1
          %s172 = smul.addr %s171, 8
          %s173 = scalar_lea.vmem [#allocation2], %s172
          %s175 = ssub.s32 128, 128
          %176 = vsyncadd %s170, %s175
          %s177 = smul.addr %s26, 4
          %s178 = sadd.s32 %s27, %s177
          %s179 = smul.addr %s178, 32
          %s180 = scalar_lea.hbm %s0, %s179
          %s181 = sshll.u32 %s173, 4
          %s182 = int_to_ptr.vmem [resolvable:$true] %s181
          %187 = dma.hbm_to_vmem [thread:$0]  %s180, 128, %s182, %s170, 32, 32, 2
        $region24: #{tpu_custom_call.1} parent=19 // pred_fallthru
          _
        // Predicated region
        $region25: #{tpu_custom_call.1} parent=19 // pred_check
          %p188 = pneg %p81
        $region26: #{tpu_custom_call.1} parent=19 // pred_check_branch
          %190 = sbr.rel (%p188) target = $region28
        $region27: #{tpu_custom_call.1} parent=19 // pred_region
          %s191 = sand.u32 %s71, 1
          %s192 = scalar_lea.sflag [#allocation7], %s191
          %s193 = sand.u32 %s71, 1
          %s194 = smul.addr %s193, 8
          %s195 = scalar_lea.vmem [#allocation6], %s194
          %s197 = ssub.s32 128, 128
          %198 = vsyncadd %s192, %s197
          %s199 = smul.addr %s26, 4
          %s200 = sadd.s32 %s27, %s199
          %s201 = smul.addr %s200, 32
          %s202 = scalar_lea.hbm %s1, %s201
          %s203 = sshll.u32 %s195, 4
          %s204 = int_to_ptr.vmem [resolvable:$true] %s203
          %209 = dma.hbm_to_vmem [thread:$0]  %s202, 128, %s204, %s192, 32, 32, 2
        $region28: #{tpu_custom_call.1} parent=19 // pred_fallthru
          _
      $region20: #{tpu_custom_call.1} parent=5 // pred_fallthru
        _
      %p210 = scmp.le.s32.totalorder 1, %s19
      %p211 = scmp.lt.s32.totalorder %s19, 3
      %p212 = pnand %p210, %p211
      %p213 = pneg %p212
      // Predicated region
      $region29: #{tpu_custom_call.1} parent=5 // pred_check
        _
      $region30: #{tpu_custom_call.1} parent=5 // pred_check_branch
        %215 = sbr.rel (%p212) target = $region32
      $region31: #{tpu_custom_call.1} parent=5 // pred_region
        %s216 = ssub.s32 %s19, 1
        %s217 = sand.u32 %s46, 1
        %s218 = scalar_lea.sflag [#allocation3], %s217
        %s219 = sand.u32 %s46, 1
        %s220 = smul.addr %s219, 8
        %s221 = scalar_lea.vmem [#allocation2], %s220
        // Predicated region
        $region33: #{tpu_custom_call.1} parent=31 // pred_check
          %p222 = pneg %p59
        $region34: #{tpu_custom_call.1} parent=31 // pred_check_branch
          %224 = sbr.rel (%p222) target = $region36
        $region35: #{tpu_custom_call.1} parent=31 // pred_region
          %225 = dma.done %s218, 128
        $region36: #{tpu_custom_call.1} parent=31 // pred_fallthru
          _
        %s226 = sand.u32 %s74, 1
        %s227 = scalar_lea.sflag [#allocation7], %s226
        %s228 = sand.u32 %s74, 1
        %s229 = smul.addr %s228, 8
        %s230 = scalar_lea.vmem [#allocation6], %s229
        // Predicated region
        $region37: #{tpu_custom_call.1} parent=31 // pred_check
          %p231 = pneg %p87
        $region38: #{tpu_custom_call.1} parent=31 // pred_check_branch
          %233 = sbr.rel (%p231) target = $region40
        $region39: #{tpu_custom_call.1} parent=31 // pred_region
          %234 = dma.done %s227, 128
        $region40: #{tpu_custom_call.1} parent=31 // pred_fallthru
          _
        // Predicated region
        $region41: #{tpu_custom_call.1} parent=31 // pred_check
          %p235 = pneg %p108
        $region42: #{tpu_custom_call.1} parent=31 // pred_check_branch
          %237 = sbr.rel (%p235) target = $region44
        $region43: #{tpu_custom_call.1} parent=31 // pred_region
          %238 = dma.done [#allocation5], 16
        $region44: #{tpu_custom_call.1} parent=31 // pred_fallthru
          _
        %239 = sfence
        %s240 = sand.u32 %s46, 1
        %s241 = scalar_lea.sflag [#allocation3], %s240
        %s242 = sand.u32 %s46, 1
        %s243 = smul.addr %s242, 8
        %s244 = scalar_lea.vmem [#allocation2], %s243
        %p245 = pneg %p59
        %p246 = pneg %p56
        %s247 = sand.u32 %s74, 1
        %s248 = scalar_lea.sflag [#allocation7], %s247
        %s249 = sand.u32 %s74, 1
        %s250 = smul.addr %s249, 8
        %s251 = scalar_lea.vmem [#allocation6], %s250
        %p252 = pneg %p87
        %p253 = pneg %p84
        %p254 = pneg %p108
        %p255 = pneg %p105
        %p256 = pneg %p136
        %p257 = pneg %p133
        %s258 = sand.u32 %s123, 1
        %s259 = scalar_lea.sflag [#allocation4], %s258
        %s260 = sand.u32 %s123, 1
        %s261 = smul.addr %s260, 8
        %s262 = scalar_lea.vmem [#allocation9], %s261
        %v263 = vld [vmem:[%s221] sm:$0x3]
        %v264 = vld [vmem:[%s230] sm:$0x3]
        %v265 = vadd.f32 %v263, %v264
        %v266 = vmax.f32 %v265, 0.0
        %s267 = sld [smem:[#allocation8]]
        %v268 = vstv %s267
        %v269 = vmul.f32 %v266, %v268
        %s270 = scalar_lea.vmem %s221, 2 [#allocation2]
        %v271 = vld [vmem:[%s270] sm:$0x3]
        %s272 = scalar_lea.vmem %s230, 2 [#allocation6]
        %v273 = vld [vmem:[%s272] sm:$0x3]
        %v274 = vadd.f32 %v271, %v273
        %v275 = vmax.f32 %v274, 0.0
        %s276 = sld [smem:[#allocation8 + $0x1]]
        %v277 = vstv %s276
        %v278 = vmul.f32 %v275, %v277
        %v279 = vadd.f32 %v269, %v278
        %s280 = scalar_lea.vmem %s221, 4 [#allocation2]
        %v281 = vld [vmem:[%s280] sm:$0x3]
        %s282 = scalar_lea.vmem %s230, 4 [#allocation6]
        %v283 = vld [vmem:[%s282] sm:$0x3]
        %v284 = vadd.f32 %v281, %v283
        %v285 = vmax.f32 %v284, 0.0
        %s286 = sld [smem:[#allocation8 + $0x2]]
        %v287 = vstv %s286
        %v288 = vmul.f32 %v285, %v287
        %v289 = vadd.f32 %v279, %v288
        %s290 = scalar_lea.vmem %s221, 6 [#allocation2]
        %v291 = vld [vmem:[%s290] sm:$0x3]
        %s292 = scalar_lea.vmem %s230, 6 [#allocation6]
        %v293 = vld [vmem:[%s292] sm:$0x3]
        %v294 = vadd.f32 %v291, %v293
        %v295 = vmax.f32 %v294, 0.0
        %s296 = sld [smem:[#allocation8 + $0x3]]
        %v297 = vstv %s296
        %v298 = vmul.f32 %v295, %v297
        %v299 = vadd.f32 %v289, %v298
        %s300 = sld [smem:[#allocation8 + $0x4]]
        %v301 = vstv %s300
        %v302 = vadd.f32 %v299, %v301
        %v303 = vxor.u32 %v302, 2147483648
        %v304 = vmul.f32 %v303, 1.442695
        %v305 = vpow.pop %v304
        %v306 = vadd.f32 %v305, 1.0
        %v307 = vrcp.pop %v306
        %v308 = vmul.f32 1.0, %v307
        %v309 = vsub.f32 %v263, %v264
        %v310 = vmul.f32 %v308, %v309
        %v311 = vadd.f32 %v264, %v310
        %312 = vst [vmem:[%s262] sm:$0x3] %v311
        %v313 = vld [vmem:[%s270] sm:$0x3]
        %v314 = vld [vmem:[%s272] sm:$0x3]
        %v315 = vsub.f32 %v313, %v314
        %v316 = vmul.f32 %v308, %v315
        %v317 = vadd.f32 %v314, %v316
        %s318 = scalar_lea.vmem %s262, 2 [#allocation9]
        %319 = vst [vmem:[%s318] sm:$0x3] %v317
        %v320 = vld [vmem:[%s280] sm:$0x3]
        %v321 = vld [vmem:[%s282] sm:$0x3]
        %v322 = vsub.f32 %v320, %v321
        %v323 = vmul.f32 %v308, %v322
        %v324 = vadd.f32 %v321, %v323
        %s325 = scalar_lea.vmem %s262, 4 [#allocation9]
        %326 = vst [vmem:[%s325] sm:$0x3] %v324
        %v327 = vld [vmem:[%s290] sm:$0x3]
        %v328 = vld [vmem:[%s292] sm:$0x3]
        %v329 = vsub.f32 %v327, %v328
        %v330 = vmul.f32 %v308, %v329
        %v331 = vadd.f32 %v328, %v330
        %s332 = scalar_lea.vmem %s262, 6 [#allocation9]
        %333 = vst [vmem:[%s332] sm:$0x3] %v331
        %s334 = sand.u32 %s123, 1
        %s335 = scalar_lea.sflag [#allocation4], %s334
        %s336 = sand.u32 %s123, 1
        %s337 = smul.addr %s336, 8
        %s338 = scalar_lea.vmem [#allocation9], %s337
        // Predicated region
        $region45: #{tpu_custom_call.1} parent=31 // pred_check
          %p339 = pneg %p133
        $region46: #{tpu_custom_call.1} parent=31 // pred_check_branch
          %341 = sbr.rel (%p339) target = $region48
        $region47: #{tpu_custom_call.1} parent=31 // pred_region
          %s343 = ssub.s32 128, 128
          %344 = vsyncadd %s335, %s343
          %s345 = smul.addr %s28, 4
          %s346 = sadd.s32 %s29, %s345
          %s347 = smul.addr %s346, 32
          %s348 = scalar_lea.hbm %s3, %s347
          %s349 = sshll.u32 %s338, 4
          %s350 = int_to_ptr.vmem [resolvable:$true] %s349
          %355 = dma.vmem_to_hbm [thread:$0]  %s350, 128, %s348, %s335, 32, 32, 2
        $region48: #{tpu_custom_call.1} parent=31 // pred_fallthru
          _
      $region32: #{tpu_custom_call.1} parent=5 // pred_fallthru
        _
      %p356 = scmp.le.s32.totalorder 2, %s19
      // Predicated region
      $region49: #{tpu_custom_call.1} parent=5 // pred_check
        %p357 = pneg %p356
      $region50: #{tpu_custom_call.1} parent=5 // pred_check_branch
        %359 = sbr.rel (%p357) target = $region52
      $region51: #{tpu_custom_call.1} parent=5 // pred_region
        %s360 = ssub.s32 %s19, 2
        // Predicated region
        $region53: #{tpu_custom_call.1} parent=51 // pred_check
          %p361 = pneg %p139
        $region54: #{tpu_custom_call.1} parent=51 // pred_check_branch
          %363 = sbr.rel (%p361) target = $region56
        $region55: #{tpu_custom_call.1} parent=51 // pred_region
          %s364 = sand.u32 %s124, 1
          %s365 = scalar_lea.sflag [#allocation4], %s364
          %s366 = sand.u32 %s124, 1
          %s367 = smul.addr %s366, 8
          %s368 = scalar_lea.vmem [#allocation9], %s367
          %369 = dma.done %s365, 128
        $region56: #{tpu_custom_call.1} parent=51 // pred_fallthru
          _
      $region52: #{tpu_custom_call.1} parent=5 // pred_fallthru
        _
    $region6: #{tpu_custom_call.1} parent=1 // loop_footer
      %s23 = sadd.s32 1, %s19
    $region7: #{tpu_custom_call.1} parent=1 // loop_footer_branch
      %18 = sbr.rel target = $region3
    $region8: #{tpu_custom_call.1} parent=1 // loop_exit
      _
    %370 = vsyncpa [#allocation3], 1
    %s371 = scalar_lea.sflag [#allocation3], 1
    %372 = vsyncpa %s371, 1
    %373 = vsyncpa [#allocation7], 1
    %s374 = scalar_lea.sflag [#allocation7], 1
    %375 = vsyncpa %s374, 1
    %376 = vsyncpa [#allocation4], 1
    %s377 = scalar_lea.sflag [#allocation4], 1
    %378 = vsyncpa %s377, 1
    %379 = vsyncpa [#allocation5], 1
    %s380 = scalar_lea.sflag [#allocation5], 1
    %381 = vsyncpa %s380, 1

</llo_original>
